<compile_context>
chip_gen: v7x
topology: tpu7x:2x2x1
jax: 0.10.0
libtpu: 0.0.40
codegen_flags: <defaults>
</compile_context>

<pallas_src>
import functools

import jax
import jax.numpy as jnp
from jax.experimental import pallas as pl
from jax.experimental.pallas import tpu as pltpu

SUBLANE = 8


def _round_up(x, m):
    return (x + m - 1) // m * m


def _choose_batch_tiling(B, tb_max):
    """Pick (Bp, TB): batch padded only to 8-sublane / tile granularity."""
    Bp = _round_up(max(B, 1), SUBLANE)
    if Bp <= tb_max:
        return Bp, Bp                       # single grid step, no padded-row waste
    n_tiles = pl.cdiv(Bp, tb_max)
    n_tiles += n_tiles % 2                  # even tile count for v7x's 2 TensorCores
    TB = _round_up(pl.cdiv(Bp, n_tiles), SUBLANE)
    Bp = TB * n_tiles
    return Bp, TB


def _autoencoder_kernel(x_ref,
                        w1_ref, b1_ref,   # encoder Linear(input_dim -> h0)
                        w2_ref, b2_ref,   # encoder Linear(h0 -> h1)
                        w3_ref, b3_ref,   # decoder Linear(h1 -> h0)
                        w4_ref, b4_ref,   # decoder Linear(h0 -> input_dim)
                        enc_ref, dec_ref):
    cdt = w1_ref.dtype
    x = x_ref[...].astype(cdt)            # compute-dtype cast in VMEM, not HBM

    # encoder: Linear -> ReLU -> Dropout(identity) -> Linear
    h0 = jnp.dot(x, w1_ref[...], preferred_element_type=jnp.float32) + b1_ref[...]
    h0 = jnp.maximum(h0, 0.0)              # f32 ReLU (v5e-safe)
    enc = jnp.dot(h0.astype(cdt), w2_ref[...],
                  preferred_element_type=jnp.float32) + b2_ref[...]
    enc_ref[...] = enc.astype(enc_ref.dtype)

    # decoder: Linear -> Dropout(identity) -> ReLU -> Linear
    d0 = jnp.dot(enc.astype(cdt), w3_ref[...],
                 preferred_element_type=jnp.float32) + b3_ref[...]
    d0 = jnp.maximum(d0, 0.0)
    dec = jnp.dot(d0.astype(cdt), w4_ref[...],
                  preferred_element_type=jnp.float32) + b4_ref[...]
    dec_ref[...] = dec.astype(dec_ref.dtype)


def _encoder_kernel(x_ref, w1_ref, b1_ref, w2_ref, b2_ref, enc_ref):
    cdt = w1_ref.dtype
    x = x_ref[...].astype(cdt)
    h0 = jnp.dot(x, w1_ref[...], preferred_element_type=jnp.float32) + b1_ref[...]
    h0 = jnp.maximum(h0, 0.0)
    enc = jnp.dot(h0.astype(cdt), w2_ref[...],
                  preferred_element_type=jnp.float32) + b2_ref[...]
    enc_ref[...] = enc.astype(enc_ref.dtype)


@functools.partial(jax.jit, static_argnames=("ret_dec", "compute_dtype", "tb_max"))
def autoencoder_forward(x, params, *, ret_dec=True,
                        compute_dtype=jnp.bfloat16, tb_max=2048):
    """params = (w1, b1, w2, b2, w3, b3, w4, b4); weights already [in, out]."""
    w1, b1, w2, b2, w3, b3, w4, b4 = params
    B, D = x.shape
    H0 = w1.shape[1]
    H1 = w2.shape[1]
    out_dtype = x.dtype
    cdt = compute_dtype

    Bp, TB = _choose_batch_tiling(B, tb_max)
    grid = (Bp // TB,)

    # Only batch rows are padded (8-sublane granularity); feature dims stay real.
    xp = x if Bp == B else jnp.pad(x, ((0, Bp - B), (0, 0)))

    # Weights: true shapes, compute dtype (VMEM-resident, negligible HBM cost).
    w1c, w2c, w3c, w4c = (w.astype(cdt) for w in (w1, w2, w3, w4))
    # Biases: f32 2D rows for lane-aligned broadcast add.
    b1c, b2c, b3c, b4c = (b.astype(jnp.float32) for b in (b1, b2, b3, b4))

    def tiled(last_dim):            # batch-tiled arrays (x, enc, dec)
        return pl.BlockSpec((TB, last_dim), lambda i: (i, 0))

    def resident(a):                # weights/biases: same block every grid step
        return pl.BlockSpec(a.shape, lambda i: (0, 0))

    compiler_params = pltpu.CompilerParams(
        dimension_semantics=("parallel",),      # v7x: shard batch tiles over 2 TCs
        vmem_limit_bytes=16 * 1024 * 1024,      # footprint is <2 MiB even at TB=2048
    )
    x_itemsize = jnp.dtype(x.dtype).itemsize
    w_itemsize = jnp.dtype(cdt).itemsize
    out_itemsize = jnp.dtype(out_dtype).itemsize

    if ret_dec:
        flops = 2 * B * (D * H0 + H0 * H1 + H1 * H0 + H0 * D)
        bytes_accessed = (B * D * x_itemsize
                          + (D * H0 + H0 * H1 + H1 * H0 + H0 * D) * w_itemsize
                          + (B * H1 + B * D) * out_itemsize)
        enc_p, dec_p = pl.pallas_call(
            _autoencoder_kernel,
            grid=grid,
            out_shape=(jax.ShapeDtypeStruct((Bp, H1), out_dtype),
                       jax.ShapeDtypeStruct((Bp, D), out_dtype)),
            in_specs=[tiled(D),
                      resident(w1c), resident(b1c),
                      resident(w2c), resident(b2c),
                      resident(w3c), resident(b3c),
                      resident(w4c), resident(b4c)],
            out_specs=(tiled(H1), tiled(D)),
            compiler_params=compiler_params,
            cost_estimate=pl.CostEstimate(flops=flops, transcendentals=0,
                                          bytes_accessed=bytes_accessed),
        )(xp, w1c, b1c, w2c, b2c, w3c, b3c, w4c, b4c)
        if Bp != B:
            enc_p, dec_p = enc_p[:B], dec_p[:B]
        return enc_p, dec_p

    # ret_dec=False: encoder only (no dec writeback stream).
    flops = 2 * B * (D * H0 + H0 * H1)
    bytes_accessed = (B * D * x_itemsize
                      + (D * H0 + H0 * H1) * w_itemsize
                      + B * H1 * out_itemsize)
    enc_p = pl.pallas_call(
        _encoder_kernel,
        grid=grid,
        out_shape=jax.ShapeDtypeStruct((Bp, H1), out_dtype),
        in_specs=[tiled(D),
                  resident(w1c), resident(b1c),
                  resident(w2c), resident(b2c)],
        out_specs=tiled(H1),
        compiler_params=compiler_params,
        cost_estimate=pl.CostEstimate(flops=flops, transcendentals=0,
                                      bytes_accessed=bytes_accessed),
    )(xp, w1c, b1c, w2c, b2c)
    if Bp != B:
        enc_p = enc_p[:B]
    return enc_p


def init_params(key, input_dim, hidden_dims):
    """PyTorch Linear stores W as [out, in]; we pre-transpose to [in, out].
    Biases kept as [1, out] for 2D broadcast."""
    h0, h1 = hidden_dims
    keys = jax.random.split(key, 8)

    def linear(kw, kb, fan_in, fan_out):
        bound = 1.0 / float(fan_in) ** 0.5
        w = jax.random.uniform(kw, (fan_in, fan_out), jnp.float32, -bound, bound)
        b = jax.random.uniform(kb, (1, fan_out), jnp.float32, -bound, bound)
        return w, b

    w1, b1 = linear(keys[0], keys[1], input_dim, h0)   # encoder.0
    w2, b2 = linear(keys[2], keys[3], h0, h1)          # encoder.3
    w3, b3 = linear(keys[4], keys[5], h1, h0)          # decoder.0
    w4, b4 = linear(keys[6], keys[7], h0, input_dim)   # decoder.3
    return (w1, b1, w2, b2, w3, b3, w4, b4)


def reference_forward(x, params, compute_dtype=jnp.float32):
    """Pure-JAX reference mirroring the kernel's per-layer operand quantization."""
    def q(a):
        return a.astype(compute_dtype).astype(jnp.float32)

    w1, b1, w2, b2, w3, b3, w4, b4 = params
    h = jnp.maximum(q(x) @ q(w1) + b1, 0.0)
    enc = q(h) @ q(w2) + b2
    d = jnp.maximum(q(enc) @ q(w3) + b3, 0.0)
    dec = q(d) @ q(w4) + b4
    return enc, dec


if __name__ == "__main__":
    input_dim = 32
    hidden_dims = [64, 16]

    key = jax.random.PRNGKey(0)
    k_x, k_p, k_x2 = jax.random.split(key, 3)
    params = init_params(k_p, input_dim, hidden_dims)

    # Case 1: small batch, f32 compute path — strict numerics.
    B = 8
    x = jax.random.normal(k_x, (B, input_dim), dtype=jnp.float32)
    enc, dec = autoencoder_forward(x, params, compute_dtype=jnp.float32)
    jax.block_until_ready((enc, dec))
    enc_ref, dec_ref = reference_forward(x, params)
    assert enc.shape == (B, hidden_dims[1])
    assert dec.shape == (B, input_dim)
    assert jnp.allclose(enc, enc_ref, atol=1e-5, rtol=1e-5)
    assert jnp.allclose(dec, dec_ref, atol=1e-5, rtol=1e-5)

    # forward(x, ret_dec=False) path: encoder only.
    enc_only = autoencoder_forward(x, params, ret_dec=False,
                                   compute_dtype=jnp.float32)
    jax.block_until_ready(enc_only)
    assert jnp.allclose(enc_only, enc_ref, atol=1e-5, rtol=1e-5)

    # Case 2: larger, non-tile-aligned batch, default bf16 MXU path.
    B2 = 385   # not a multiple of 8: exercises the batch-row pad/slice path
    x2 = jax.random.normal(k_x2, (B2, input_dim), dtype=jnp.float32)
    enc2, dec2 = autoencoder_forward(x2, params)   # compute_dtype=bf16 default
    jax.block_until_ready((enc2, dec2))
    enc2_ref, dec2_ref = reference_forward(x2, params, compute_dtype=jnp.bfloat16)
    assert enc2.shape == (B2, hidden_dims[1])
    assert dec2.shape == (B2, input_dim)
    assert jnp.allclose(enc2, enc2_ref, atol=2e-3, rtol=2e-2)
    assert jnp.allclose(dec2, dec2_ref, atol=2e-3, rtol=2e-2)

    print("KERNEL_OK")
</pallas_src>

<mosaic_0001>
module attributes {stable_mosaic.version = 11 : i64} {
  func.func @_autoencoder_kernel(%arg0: i32, %arg1: memref<8x32xf32, #tpu.memory_space<vmem>>, %arg2: memref<32x64xf32, #tpu.memory_space<vmem>>, %arg3: memref<1x64xf32, #tpu.memory_space<vmem>>, %arg4: memref<64x16xf32, #tpu.memory_space<vmem>>, %arg5: memref<1x16xf32, #tpu.memory_space<vmem>>, %arg6: memref<16x64xf32, #tpu.memory_space<vmem>>, %arg7: memref<1x64xf32, #tpu.memory_space<vmem>>, %arg8: memref<64x32xf32, #tpu.memory_space<vmem>>, %arg9: memref<1x32xf32, #tpu.memory_space<vmem>>, %arg10: memref<8x16xf32, #tpu.memory_space<vmem>>, %arg11: memref<8x32xf32, #tpu.memory_space<vmem>>) attributes {dimension_semantics = [#tpu.dimension_semantics<parallel>], iteration_bounds = array<i64: 1>, scalar_prefetch = 0 : i64, scratch_operands = 0 : i64, tpu.core_type = #tpu.core_type<tc>, window_params = [{transform_indices = @transform_0, window_bounds = array<i64: 8, 32>}, {pipeline_mode = #tpu.pipeline_mode<synchronous>, transform_indices = @transform_1, window_bounds = array<i64: 32, 64>}, {pipeline_mode = #tpu.pipeline_mode<synchronous>, transform_indices = @transform_2, window_bounds = array<i64: 1, 64>}, {pipeline_mode = #tpu.pipeline_mode<synchronous>, transform_indices = @transform_3, window_bounds = array<i64: 64, 16>}, {pipeline_mode = #tpu.pipeline_mode<synchronous>, transform_indices = @transform_4, window_bounds = array<i64: 1, 16>}, {pipeline_mode = #tpu.pipeline_mode<synchronous>, transform_indices = @transform_5, window_bounds = array<i64: 16, 64>}, {pipeline_mode = #tpu.pipeline_mode<synchronous>, transform_indices = @transform_6, window_bounds = array<i64: 1, 64>}, {pipeline_mode = #tpu.pipeline_mode<synchronous>, transform_indices = @transform_7, window_bounds = array<i64: 64, 32>}, {pipeline_mode = #tpu.pipeline_mode<synchronous>, transform_indices = @transform_8, window_bounds = array<i64: 1, 32>}, {transform_indices = @transform_9, window_bounds = array<i64: 8, 16>}, {transform_indices = @transform_10, window_bounds = array<i64: 8, 32>}]} {
    %c0 = arith.constant 0 : index
    %c0_0 = arith.constant 0 : index
    %0 = vector.load %arg1[%c0, %c0_0] : memref<8x32xf32, #tpu.memory_space<vmem>>, vector<8x32xf32>
    %c0_1 = arith.constant 0 : index
    %c0_2 = arith.constant 0 : index
    %1 = vector.load %arg2[%c0_1, %c0_2] : memref<32x64xf32, #tpu.memory_space<vmem>>, vector<32x64xf32>
    %cst = arith.constant dense<0.000000e+00> : vector<8x64xf32>
    %2 = tpu.matmul %0, %1, %cst {dimension_numbers = #tpu.dot_dimension_numbers<[1], [0], [0], [1], [0, 0, 1, 1], [], []>} : vector<8x32xf32>, vector<32x64xf32>, vector<8x64xf32> -> vector<8x64xf32>
    %c0_3 = arith.constant 0 : index
    %c0_4 = arith.constant 0 : index
    %3 = vector.load %arg3[%c0_3, %c0_4] : memref<1x64xf32, #tpu.memory_space<vmem>>, vector<1x64xf32>
    %4 = vector.broadcast %3 : vector<1x64xf32> to vector<8x64xf32>
    %5 = arith.addf %2, %4 : vector<8x64xf32>
    %cst_5 = arith.constant 0.000000e+00 : f32
    %6 = vector.broadcast %cst_5 : f32 to vector<8x64xf32>
    %7 = arith.maximumf %5, %6 : vector<8x64xf32>
    %c0_6 = arith.constant 0 : index
    %c0_7 = arith.constant 0 : index
    %8 = vector.load %arg4[%c0_6, %c0_7] : memref<64x16xf32, #tpu.memory_space<vmem>>, vector<64x16xf32>
    %cst_8 = arith.constant dense<0.000000e+00> : vector<8x16xf32>
    %9 = tpu.matmul %7, %8, %cst_8 {dimension_numbers = #tpu.dot_dimension_numbers<[1], [0], [0], [1], [0, 0, 1, 1], [], []>} : vector<8x64xf32>, vector<64x16xf32>, vector<8x16xf32> -> vector<8x16xf32>
    %c0_9 = arith.constant 0 : index
    %c0_10 = arith.constant 0 : index
    %10 = vector.load %arg5[%c0_9, %c0_10] : memref<1x16xf32, #tpu.memory_space<vmem>>, vector<1x16xf32>
    %11 = vector.broadcast %10 : vector<1x16xf32> to vector<8x16xf32>
    %12 = arith.addf %9, %11 : vector<8x16xf32>
    %c0_11 = arith.constant 0 : index
    %c0_12 = arith.constant 0 : index
    %13 = vector.load %arg10[%c0_11, %c0_12] : memref<8x16xf32, #tpu.memory_space<vmem>>, vector<8x16xf32>
    tpu.vector_store %arg10[%c0_11, %c0_12], %12 {strides = array<i32>} : memref<8x16xf32, #tpu.memory_space<vmem>>, vector<8x16xf32>,
    %c0_13 = arith.constant 0 : index
    %c0_14 = arith.constant 0 : index
    %14 = vector.load %arg6[%c0_13, %c0_14] : memref<16x64xf32, #tpu.memory_space<vmem>>, vector<16x64xf32>
    %cst_15 = arith.constant dense<0.000000e+00> : vector<8x64xf32>
    %15 = tpu.matmul %12, %14, %cst_15 {dimension_numbers = #tpu.dot_dimension_numbers<[1], [0], [0], [1], [0, 0, 1, 1], [], []>} : vector<8x16xf32>, vector<16x64xf32>, vector<8x64xf32> -> vector<8x64xf32>
    %c0_16 = arith.constant 0 : index
    %c0_17 = arith.constant 0 : index
    %16 = vector.load %arg7[%c0_16, %c0_17] : memref<1x64xf32, #tpu.memory_space<vmem>>, vector<1x64xf32>
    %17 = vector.broadcast %16 : vector<1x64xf32> to vector<8x64xf32>
    %18 = arith.addf %15, %17 : vector<8x64xf32>
    %cst_18 = arith.constant 0.000000e+00 : f32
    %19 = vector.broadcast %cst_18 : f32 to vector<8x64xf32>
    %20 = arith.maximumf %18, %19 : vector<8x64xf32>
    %c0_19 = arith.constant 0 : index
    %c0_20 = arith.constant 0 : index
    %21 = vector.load %arg8[%c0_19, %c0_20] : memref<64x32xf32, #tpu.memory_space<vmem>>, vector<64x32xf32>
    %cst_21 = arith.constant dense<0.000000e+00> : vector<8x32xf32>
    %22 = tpu.matmul %20, %21, %cst_21 {dimension_numbers = #tpu.dot_dimension_numbers<[1], [0], [0], [1], [0, 0, 1, 1], [], []>} : vector<8x64xf32>, vector<64x32xf32>, vector<8x32xf32> -> vector<8x32xf32>
    %c0_22 = arith.constant 0 : index
    %c0_23 = arith.constant 0 : index
    %23 = vector.load %arg9[%c0_22, %c0_23] : memref<1x32xf32, #tpu.memory_space<vmem>>, vector<1x32xf32>
    %24 = vector.broadcast %23 : vector<1x32xf32> to vector<8x32xf32>
    %25 = arith.addf %22, %24 : vector<8x32xf32>
    %c0_24 = arith.constant 0 : index
    %c0_25 = arith.constant 0 : index
    %26 = vector.load %arg11[%c0_24, %c0_25] : memref<8x32xf32, #tpu.memory_space<vmem>>, vector<8x32xf32>
    tpu.vector_store %arg11[%c0_24, %c0_25], %25 {strides = array<i32>} : memref<8x32xf32, #tpu.memory_space<vmem>>, vector<8x32xf32>,
    return
  }
  func.func @transform_0(%arg0: i32) -> (i32, i32) {
    %c0_i32 = arith.constant 0 : i32
    %c0_i32_0 = arith.constant 0 : i32
    return %arg0, %c0_i32 : i32, i32
  }
  func.func @transform_1(%arg0: i32) -> (i32, i32) {
    %c0_i32 = arith.constant 0 : i32
    %c0_i32_0 = arith.constant 0 : i32
    %c0_i32_1 = arith.constant 0 : i32
    return %c0_i32, %c0_i32_0 : i32, i32
  }
  func.func @transform_2(%arg0: i32) -> (i32, i32) {
    %c0_i32 = arith.constant 0 : i32
    %c0_i32_0 = arith.constant 0 : i32
    %c0_i32_1 = arith.constant 0 : i32
    return %c0_i32, %c0_i32_0 : i32, i32
  }
  func.func @transform_3(%arg0: i32) -> (i32, i32) {
    %c0_i32 = arith.constant 0 : i32
    %c0_i32_0 = arith.constant 0 : i32
    %c0_i32_1 = arith.constant 0 : i32
    return %c0_i32, %c0_i32_0 : i32, i32
  }
  func.func @transform_4(%arg0: i32) -> (i32, i32) {
    %c0_i32 = arith.constant 0 : i32
    %c0_i32_0 = arith.constant 0 : i32
    %c0_i32_1 = arith.constant 0 : i32
    return %c0_i32, %c0_i32_0 : i32, i32
  }
  func.func @transform_5(%arg0: i32) -> (i32, i32) {
    %c0_i32 = arith.constant 0 : i32
    %c0_i32_0 = arith.constant 0 : i32
    %c0_i32_1 = arith.constant 0 : i32
    return %c0_i32, %c0_i32_0 : i32, i32
  }
  func.func @transform_6(%arg0: i32) -> (i32, i32) {
    %c0_i32 = arith.constant 0 : i32
    %c0_i32_0 = arith.constant 0 : i32
    %c0_i32_1 = arith.constant 0 : i32
    return %c0_i32, %c0_i32_0 : i32, i32
  }
  func.func @transform_7(%arg0: i32) -> (i32, i32) {
    %c0_i32 = arith.constant 0 : i32
    %c0_i32_0 = arith.constant 0 : i32
    %c0_i32_1 = arith.constant 0 : i32
    return %c0_i32, %c0_i32_0 : i32, i32
  }
  func.func @transform_8(%arg0: i32) -> (i32, i32) {
    %c0_i32 = arith.constant 0 : i32
    %c0_i32_0 = arith.constant 0 : i32
    %c0_i32_1 = arith.constant 0 : i32
    return %c0_i32, %c0_i32_0 : i32, i32
  }
  func.func @transform_9(%arg0: i32) -> (i32, i32) {
    %c0_i32 = arith.constant 0 : i32
    %c0_i32_0 = arith.constant 0 : i32
    return %arg0, %c0_i32 : i32, i32
  }
  func.func @transform_10(%arg0: i32) -> (i32, i32) {
    %c0_i32 = arith.constant 0 : i32
    %c0_i32_0 = arith.constant 0 : i32
    return %arg0, %c0_i32 : i32, i32
  }
}

</mosaic_0001>

<llo_original>
// kernel: autoencoder_forward.1
$region0: #{autoencoder_forward.1}
  #allocation0 [shape = 'u32[]', space=smem, size = 0x4, offset = 0x4, fixed_abs, tag = 'smem constant byte address 0x4 - core index']
  #allocation1 [shape = 'u32[144,128]{1,0:T(1,128)}', space=vmem, size = 0x12000, scoped, tag = 'internal scratch']
  %s0 = inlined_call_operand.vmem [shape: f32[8,32], index: 0, kind: input, shape index: {}]
  %s1 = inlined_call_operand.vmem [shape: f32[32,64], index: 1, kind: input, shape index: {}]
  %s2 = inlined_call_operand.vmem [shape: f32[1,64], index: 2, kind: input, shape index: {}]
  %s3 = inlined_call_operand.vmem [shape: f32[64,16], index: 3, kind: input, shape index: {}]
  %s4 = inlined_call_operand.vmem [shape: f32[1,16], index: 4, kind: input, shape index: {}]
  %s5 = inlined_call_operand.vmem [shape: f32[16,64], index: 5, kind: input, shape index: {}]
  %s6 = inlined_call_operand.vmem [shape: f32[1,64], index: 6, kind: input, shape index: {}]
  %s7 = inlined_call_operand.vmem [shape: f32[64,32], index: 7, kind: input, shape index: {}]
  %s8 = inlined_call_operand.vmem [shape: f32[1,32], index: 8, kind: input, shape index: {}]
  %s9 = inlined_call_operand.hbm [shape: f32[8,16], index: 9, kind: output, shape index: {0}]
  %s10 = inlined_call_operand.hbm [shape: f32[8,32], index: 10, kind: output, shape index: {1}]
  %11 = xla_tuple %s9, %s10
  %s12 = sld [smem:[#allocation0]]
  $region54: #{autoencoder_forward.1} parent=0
    _
  %s14 = ssub.s32 1, %s12
  %s15 = scalar_select 0, %s14, %s12
  $region1: #{autoencoder_forward.1} parent=0
    #allocation2 [shape = 'u8[4096]{0}', space=vmem, size = 0x1000, scoped, tag = 'output window, operand 0, single buffered']
    #allocation3 [shape = 's32[1]{0}', space=sflag, size = 0x4, scoped, tag = 'scoped memory for autoencoder_forward.1']
    #allocation4 [shape = 'u8[4096]{0}', space=vmem, size = 0x1000, scoped, tag = 'output window, operand 1, single buffered']
    #allocation5 [shape = 's32[1]{0}', space=sflag, size = 0x4, scoped, tag = 'scoped memory for autoencoder_forward.1']
    %16 = vsyncpa [#allocation3], 0
    %17 = vsyncpa [#allocation5], 0
    // Predicated region
    $region2: #{autoencoder_forward.1} parent=1 // pred_check
      _
    $region3: #{autoencoder_forward.1} parent=1 // pred_check_branch
      %19 = sbr.rel (0) target = $region5
    $region4: #{autoencoder_forward.1} parent=1 // pred_region
      _
    $region5: #{autoencoder_forward.1} parent=1 // pred_fallthru
      _
    // Predicated region
    $region6: #{autoencoder_forward.1} parent=1 // pred_check
      _
    $region7: #{autoencoder_forward.1} parent=1 // pred_check_branch
      %21 = sbr.rel (0) target = $region9
    $region8: #{autoencoder_forward.1} parent=1 // pred_region
      _
    $region9: #{autoencoder_forward.1} parent=1 // pred_fallthru
      _
    // Predicated region
    $region10: #{autoencoder_forward.1} parent=1 // pred_check
      _
    $region11: #{autoencoder_forward.1} parent=1 // pred_check_branch
      %23 = sbr.rel (0) target = $region13
    $region12: #{autoencoder_forward.1} parent=1 // pred_region
      _
    $region13: #{autoencoder_forward.1} parent=1 // pred_fallthru
      _
    // Predicated region
    $region14: #{autoencoder_forward.1} parent=1 // pred_check
      _
    $region15: #{autoencoder_forward.1} parent=1 // pred_check_branch
      %25 = sbr.rel (0) target = $region17
    $region16: #{autoencoder_forward.1} parent=1 // pred_region
      _
    $region17: #{autoencoder_forward.1} parent=1 // pred_fallthru
      _
    // Predicated region
    $region18: #{autoencoder_forward.1} parent=1 // pred_check
      _
    $region19: #{autoencoder_forward.1} parent=1 // pred_check_branch
      %27 = sbr.rel (0) target = $region21
    $region20: #{autoencoder_forward.1} parent=1 // pred_region
      _
    $region21: #{autoencoder_forward.1} parent=1 // pred_fallthru
      _
    // Predicated region
    $region22: #{autoencoder_forward.1} parent=1 // pred_check
      _
    $region23: #{autoencoder_forward.1} parent=1 // pred_check_branch
      %29 = sbr.rel (0) target = $region25
    $region24: #{autoencoder_forward.1} parent=1 // pred_region
      _
    $region25: #{autoencoder_forward.1} parent=1 // pred_fallthru
      _
    // Predicated region
    $region26: #{autoencoder_forward.1} parent=1 // pred_check
      _
    $region27: #{autoencoder_forward.1} parent=1 // pred_check_branch
      %31 = sbr.rel (0) target = $region29
    $region28: #{autoencoder_forward.1} parent=1 // pred_region
      _
    $region29: #{autoencoder_forward.1} parent=1 // pred_fallthru
      _
    // Predicated region
    $region30: #{autoencoder_forward.1} parent=1 // pred_check
      _
    $region31: #{autoencoder_forward.1} parent=1 // pred_check_branch
      %33 = sbr.rel (0) target = $region33
    $region32: #{autoencoder_forward.1} parent=1 // pred_region
      _
    $region33: #{autoencoder_forward.1} parent=1 // pred_fallthru
      _
    // Predicated region
    $region34: #{autoencoder_forward.1} parent=1 // pred_check
      _
    $region35: #{autoencoder_forward.1} parent=1 // pred_check_branch
      %35 = sbr.rel (0) target = $region37
    $region36: #{autoencoder_forward.1} parent=1 // pred_region
      _
    $region37: #{autoencoder_forward.1} parent=1 // pred_fallthru
      _
    %v36 = vld [vmem:[%s0] sm:$0xff]
    %v37 = vld [vmem:[%s1] sm:$0xff]
    %v38 = vld [vmem:[%s1 + $0x8] sm:$0xff]
    %v39 = vld [vmem:[%s1 + $0x10] sm:$0xff]
    %v40 = vld [vmem:[%s1 + $0x18] sm:$0xff]
    %v41 = vld [vmem:[%s2] sm:$0x1]
    %v43 = vlaneseq
    %v44 = vshrl.u32 %v43, 7
    %v45 = vsub.s32 0, %v44
    %v46 = vrot.slane %v41, %v45
    %vm48 = vcmask 261120
    %v50 = vsel %vm48, %v36, 0
    %52 = vmatprep.subr.mxu0 0.0
    %53 = vmatpush1.msra.mxu0 %v37
    %54 = vmatprep.subr.mxu0 0.0
    %55 = vmatpush1.msra.mxu0 %v38
    %56 = vmatprep.subr.mxu0 0.0
    %57 = vmatpush1.msra.mxu0 %v39
    %58 = vmatprep.subr.mxu0 0.0
    %59 = vmatpush1.msra.mxu0 %v40
    %60 = vmatprep.subr.mxu0 0.0
    %61 = vmatpush1.msra.mxu0 0.0
    %62 = vmatprep.subr.mxu0 0.0
    %63 = vmatpush1.msra.mxu0 0.0
    %64 = vmatprep.subr.mxu0 0.0
    %65 = vmatpush1.msra.mxu0 0.0
    %66 = vmatprep.subr.mxu0 0.0
    %67 = vmatpush1.msra.mxu0 0.0
    %68 = vmatprep.subr.mxu0 0.0
    %69 = vmatpush1.msra.mxu0 0.0
    %70 = vmatprep.subr.mxu0 0.0
    %71 = vmatpush1.msra.mxu0 0.0
    %72 = vmatprep.subr.mxu0 0.0
    %73 = vmatpush1.msra.mxu0 0.0
    %74 = vmatprep.subr.mxu0 0.0
    %75 = vmatpush1.msra.mxu0 0.0
    %76 = vmatprep.subr.mxu0 0.0
    %77 = vmatpush1.msra.mxu0 0.0
    %78 = vmatprep.subr.mxu0 0.0
    %79 = vmatpush1.msra.mxu0 0.0
    %80 = vmatprep.subr.mxu0 0.0
    %81 = vmatpush1.msra.mxu0 0.0
    %82 = vmatprep.subr.mxu0 0.0
    %83 = vmatpush1.msra.mxu0 0.0
    %84 = vmatprep.subr.mxu0 0.0
    %85 = vmatpush1.msra.mxu0 0.0
    %86 = vmatprep.subr.mxu0 0.0
    %87 = vmatpush1.msra.mxu0 0.0
    %88 = vmatprep.subr.mxu0 0.0
    %89 = vmatpush1.msra.mxu0 0.0
    %90 = vmatprep.subr.mxu0 0.0
    %91 = vmatpush1.msra.mxu0 0.0
    %92 = vmatprep.subr.mxu0 0.0
    %93 = vmatpush1.msra.mxu0 0.0
    %94 = vmatprep.subr.mxu0 0.0
    %95 = vmatpush1.msra.mxu0 0.0
    %96 = vmatprep.subr.mxu0 0.0
    %97 = vmatpush1.msra.mxu0 0.0
    %98 = vmatprep.subr.mxu0 0.0
    %99 = vmatpush1.msra.mxu0 0.0
    %100 = vmatprep.subr.mxu0 0.0
    %101 = vmatpush1.msra.mxu0 0.0
    %102 = vmatprep.subr.mxu0 0.0
    %103 = vmatpush1.msra.mxu0 0.0
    %104 = vmatprep.subr.mxu0 0.0
    %105 = vmatpush1.msra.mxu0 0.0
    %106 = vmatprep.subr.mxu0 0.0
    %107 = vmatpush1.msra.mxu0 0.0
    %108 = vmatprep.subr.mxu0 0.0
    %109 = vmatpush1.msra.mxu0 0.0
    %110 = vmatprep.subr.mxu0 0.0
    %111 = vmatpush1.msra.mxu0 0.0
    %112 = vmatprep.subr.mxu0 0.0
    %113 = vmatpush1.msra.mxu0 0.0
    %114 = vmatprep.subr.mxu0 0.0
    %115 = vmatpush1.msra.mxu0 0.0
    %116 = vmatprep.mubr.f32.mxu0 0.0
    %117 = vmatmul.mubr.f32.gmra.mrb[0].mxu0 %v50
    %v118 = vpop.f32.mrb[0].mxu0
    %v119 = vadd.f32 %v46, %v118
    %v120 = vpop.f32.mrb[0].mxu0
    %121 = vdwg.mxu0
    %v122 = vmax.f32 %v119, 0.0
    %v123 = vld [vmem:[%s3] sm:$0xff]
    %v124 = vld [vmem:[%s3 + $0x8] sm:$0xff]
    %v125 = vld [vmem:[%s3 + $0x10] sm:$0xff]
    %v126 = vld [vmem:[%s3 + $0x18] sm:$0xff]
    %v127 = vld [vmem:[%s3 + $0x20] sm:$0xff]
    %v128 = vld [vmem:[%s3 + $0x28] sm:$0xff]
    %v129 = vld [vmem:[%s3 + $0x30] sm:$0xff]
    %v130 = vld [vmem:[%s3 + $0x38] sm:$0xff]
    %v131 = vld [vmem:[%s4] sm:$0x1]
    %v133 = vlaneseq
    %v134 = vshrl.u32 %v133, 7
    %v135 = vsub.s32 0, %v134
    %v136 = vrot.slane %v131, %v135
    %vm138 = vcmask 523264
    %v140 = vsel %vm138, %v122, 0
    %142 = vmatprep.subr.mxu0 0.0
    %143 = vmatpush1.msra.mxu0 %v123
    %144 = vmatprep.subr.mxu0 0.0
    %145 = vmatpush1.msra.mxu0 %v124
    %146 = vmatprep.subr.mxu0 0.0
    %147 = vmatpush1.msra.mxu0 %v125
    %148 = vmatprep.subr.mxu0 0.0
    %149 = vmatpush1.msra.mxu0 %v126
    %150 = vmatprep.subr.mxu0 0.0
    %151 = vmatpush1.msra.mxu0 %v127
    %152 = vmatprep.subr.mxu0 0.0
    %153 = vmatpush1.msra.mxu0 %v128
    %154 = vmatprep.subr.mxu0 0.0
    %155 = vmatpush1.msra.mxu0 %v129
    %156 = vmatprep.subr.mxu0 0.0
    %157 = vmatpush1.msra.mxu0 %v130
    %158 = vmatprep.subr.mxu0 0.0
    %159 = vmatpush1.msra.mxu0 0.0
    %160 = vmatprep.subr.mxu0 0.0
    %161 = vmatpush1.msra.mxu0 0.0
    %162 = vmatprep.subr.mxu0 0.0
    %163 = vmatpush1.msra.mxu0 0.0
    %164 = vmatprep.subr.mxu0 0.0
    %165 = vmatpush1.msra.mxu0 0.0
    %166 = vmatprep.subr.mxu0 0.0
    %167 = vmatpush1.msra.mxu0 0.0
    %168 = vmatprep.subr.mxu0 0.0
    %169 = vmatpush1.msra.mxu0 0.0
    %170 = vmatprep.subr.mxu0 0.0
    %171 = vmatpush1.msra.mxu0 0.0
    %172 = vmatprep.subr.mxu0 0.0
    %173 = vmatpush1.msra.mxu0 0.0
    %174 = vmatprep.subr.mxu0 0.0
    %175 = vmatpush1.msra.mxu0 0.0
    %176 = vmatprep.subr.mxu0 0.0
    %177 = vmatpush1.msra.mxu0 0.0
    %178 = vmatprep.subr.mxu0 0.0
    %179 = vmatpush1.msra.mxu0 0.0
    %180 = vmatprep.subr.mxu0 0.0
    %181 = vmatpush1.msra.mxu0 0.0
    %182 = vmatprep.subr.mxu0 0.0
    %183 = vmatpush1.msra.mxu0 0.0
    %184 = vmatprep.subr.mxu0 0.0
    %185 = vmatpush1.msra.mxu0 0.0
    %186 = vmatprep.subr.mxu0 0.0
    %187 = vmatpush1.msra.mxu0 0.0
    %188 = vmatprep.subr.mxu0 0.0
    %189 = vmatpush1.msra.mxu0 0.0
    %190 = vmatprep.subr.mxu0 0.0
    %191 = vmatpush1.msra.mxu0 0.0
    %192 = vmatprep.subr.mxu0 0.0
    %193 = vmatpush1.msra.mxu0 0.0
    %194 = vmatprep.subr.mxu0 0.0
    %195 = vmatpush1.msra.mxu0 0.0
    %196 = vmatprep.subr.mxu0 0.0
    %197 = vmatpush1.msra.mxu0 0.0
    %198 = vmatprep.subr.mxu0 0.0
    %199 = vmatpush1.msra.mxu0 0.0
    %200 = vmatprep.subr.mxu0 0.0
    %201 = vmatpush1.msra.mxu0 0.0
    %202 = vmatprep.subr.mxu0 0.0
    %203 = vmatpush1.msra.mxu0 0.0
    %204 = vmatprep.subr.mxu0 0.0
    %205 = vmatpush1.msra.mxu0 0.0
    %206 = vmatprep.mubr.f32.mxu0 0.0
    %207 = vmatmul.mubr.f32.gmra.mrb[0].mxu0 %v140
    %v208 = vpop.f32.mrb[0].mxu0
    %v209 = vadd.f32 %v136, %v208
    %v210 = vpop.f32.mrb[0].mxu0
    %211 = vdwg.mxu0
    %vm212 = vcmask 130048
    %213 = vst.msk [vmem:[#allocation2] sm:$0xff] %vm212, %v209
    %v214 = vld [vmem:[%s5] sm:$0xff]
    %v215 = vld [vmem:[%s5 + $0x8] sm:$0xff]
    %v216 = vld [vmem:[%s6] sm:$0x1]
    %v218 = vlaneseq
    %v219 = vshrl.u32 %v218, 7
    %v220 = vsub.s32 0, %v219
    %v221 = vrot.slane %v216, %v220
    %v224 = vsel %vm212, %v209, 0
    %226 = vmatprep.subr.mxu0 0.0
    %227 = vmatpush1.msra.mxu0 %v214
    %228 = vmatprep.subr.mxu0 0.0
    %229 = vmatpush1.msra.mxu0 %v215
    %230 = vmatprep.subr.mxu0 0.0
    %231 = vmatpush1.msra.mxu0 0.0
    %232 = vmatprep.subr.mxu0 0.0
    %233 = vmatpush1.msra.mxu0 0.0
    %234 = vmatprep.subr.mxu0 0.0
    %235 = vmatpush1.msra.mxu0 0.0
    %236 = vmatprep.subr.mxu0 0.0
    %237 = vmatpush1.msra.mxu0 0.0
    %238 = vmatprep.subr.mxu0 0.0
    %239 = vmatpush1.msra.mxu0 0.0
    %240 = vmatprep.subr.mxu0 0.0
    %241 = vmatpush1.msra.mxu0 0.0
    %242 = vmatprep.subr.mxu0 0.0
    %243 = vmatpush1.msra.mxu0 0.0
    %244 = vmatprep.subr.mxu0 0.0
    %245 = vmatpush1.msra.mxu0 0.0
    %246 = vmatprep.subr.mxu0 0.0
    %247 = vmatpush1.msra.mxu0 0.0
    %248 = vmatprep.subr.mxu0 0.0
    %249 = vmatpush1.msra.mxu0 0.0
    %250 = vmatprep.subr.mxu0 0.0
    %251 = vmatpush1.msra.mxu0 0.0
    %252 = vmatprep.subr.mxu0 0.0
    %253 = vmatpush1.msra.mxu0 0.0
    %254 = vmatprep.subr.mxu0 0.0
    %255 = vmatpush1.msra.mxu0 0.0
    %256 = vmatprep.subr.mxu0 0.0
    %257 = vmatpush1.msra.mxu0 0.0
    %258 = vmatprep.subr.mxu0 0.0
    %259 = vmatpush1.msra.mxu0 0.0
    %260 = vmatprep.subr.mxu0 0.0
    %261 = vmatpush1.msra.mxu0 0.0
    %262 = vmatprep.subr.mxu0 0.0
    %263 = vmatpush1.msra.mxu0 0.0
    %264 = vmatprep.subr.mxu0 0.0
    %265 = vmatpush1.msra.mxu0 0.0
    %266 = vmatprep.subr.mxu0 0.0
    %267 = vmatpush1.msra.mxu0 0.0
    %268 = vmatprep.subr.mxu0 0.0
    %269 = vmatpush1.msra.mxu0 0.0
    %270 = vmatprep.subr.mxu0 0.0
    %271 = vmatpush1.msra.mxu0 0.0
    %272 = vmatprep.subr.mxu0 0.0
    %273 = vmatpush1.msra.mxu0 0.0
    %274 = vmatprep.subr.mxu0 0.0
    %275 = vmatpush1.msra.mxu0 0.0
    %276 = vmatprep.subr.mxu0 0.0
    %277 = vmatpush1.msra.mxu0 0.0
    %278 = vmatprep.subr.mxu0 0.0
    %279 = vmatpush1.msra.mxu0 0.0
    %280 = vmatprep.subr.mxu0 0.0
    %281 = vmatpush1.msra.mxu0 0.0
    %282 = vmatprep.subr.mxu0 0.0
    %283 = vmatpush1.msra.mxu0 0.0
    %284 = vmatprep.subr.mxu0 0.0
    %285 = vmatpush1.msra.mxu0 0.0
    %286 = vmatprep.subr.mxu0 0.0
    %287 = vmatpush1.msra.mxu0 0.0
    %288 = vmatprep.subr.mxu0 0.0
    %289 = vmatpush1.msra.mxu0 0.0
    %290 = vmatprep.mubr.f32.mxu0 0.0
    %291 = vmatmul.mubr.f32.gmra.mrb[0].mxu0 %v224
    %v292 = vpop.f32.mrb[0].mxu0
    %v293 = vadd.f32 %v221, %v292
    %v294 = vpop.f32.mrb[0].mxu0
    %295 = vdwg.mxu0
    %v296 = vmax.f32 %v293, 0.0
    %v297 = vld [vmem:[%s7] sm:$0xff]
    %v298 = vld [vmem:[%s7 + $0x8] sm:$0xff]
    %v299 = vld [vmem:[%s7 + $0x10] sm:$0xff]
    %v300 = vld [vmem:[%s7 + $0x18] sm:$0xff]
    %v301 = vld [vmem:[%s7 + $0x20] sm:$0xff]
    %v302 = vld [vmem:[%s7 + $0x28] sm:$0xff]
    %v303 = vld [vmem:[%s7 + $0x30] sm:$0xff]
    %v304 = vld [vmem:[%s7 + $0x38] sm:$0xff]
    %v305 = vld [vmem:[%s8] sm:$0x1]
    %v307 = vlaneseq
    %v308 = vshrl.u32 %v307, 7
    %v309 = vsub.s32 0, %v308
    %v310 = vrot.slane %v305, %v309
    %v313 = vsel %vm138, %v296, 0
    %315 = vmatprep.subr.mxu0 0.0
    %316 = vmatpush1.msra.mxu0 %v297
    %317 = vmatprep.subr.mxu0 0.0
    %318 = vmatpush1.msra.mxu0 %v298
    %319 = vmatprep.subr.mxu0 0.0
    %320 = vmatpush1.msra.mxu0 %v299
    %321 = vmatprep.subr.mxu0 0.0
    %322 = vmatpush1.msra.mxu0 %v300
    %323 = vmatprep.subr.mxu0 0.0
    %324 = vmatpush1.msra.mxu0 %v301
    %325 = vmatprep.subr.mxu0 0.0
    %326 = vmatpush1.msra.mxu0 %v302
    %327 = vmatprep.subr.mxu0 0.0
    %328 = vmatpush1.msra.mxu0 %v303
    %329 = vmatprep.subr.mxu0 0.0
    %330 = vmatpush1.msra.mxu0 %v304
    %331 = vmatprep.subr.mxu0 0.0
    %332 = vmatpush1.msra.mxu0 0.0
    %333 = vmatprep.subr.mxu0 0.0
    %334 = vmatpush1.msra.mxu0 0.0
    %335 = vmatprep.subr.mxu0 0.0
    %336 = vmatpush1.msra.mxu0 0.0
    %337 = vmatprep.subr.mxu0 0.0
    %338 = vmatpush1.msra.mxu0 0.0
    %339 = vmatprep.subr.mxu0 0.0
    %340 = vmatpush1.msra.mxu0 0.0
    %341 = vmatprep.subr.mxu0 0.0
    %342 = vmatpush1.msra.mxu0 0.0
    %343 = vmatprep.subr.mxu0 0.0
    %344 = vmatpush1.msra.mxu0 0.0
    %345 = vmatprep.subr.mxu0 0.0
    %346 = vmatpush1.msra.mxu0 0.0
    %347 = vmatprep.subr.mxu0 0.0
    %348 = vmatpush1.msra.mxu0 0.0
    %349 = vmatprep.subr.mxu0 0.0
    %350 = vmatpush1.msra.mxu0 0.0
    %351 = vmatprep.subr.mxu0 0.0
    %352 = vmatpush1.msra.mxu0 0.0
    %353 = vmatprep.subr.mxu0 0.0
    %354 = vmatpush1.msra.mxu0 0.0
    %355 = vmatprep.subr.mxu0 0.0
    %356 = vmatpush1.msra.mxu0 0.0
    %357 = vmatprep.subr.mxu0 0.0
    %358 = vmatpush1.msra.mxu0 0.0
    %359 = vmatprep.subr.mxu0 0.0
    %360 = vmatpush1.msra.mxu0 0.0
    %361 = vmatprep.subr.mxu0 0.0
    %362 = vmatpush1.msra.mxu0 0.0
    %363 = vmatprep.subr.mxu0 0.0
    %364 = vmatpush1.msra.mxu0 0.0
    %365 = vmatprep.subr.mxu0 0.0
    %366 = vmatpush1.msra.mxu0 0.0
    %367 = vmatprep.subr.mxu0 0.0
    %368 = vmatpush1.msra.mxu0 0.0
    %369 = vmatprep.subr.mxu0 0.0
    %370 = vmatpush1.msra.mxu0 0.0
    %371 = vmatprep.subr.mxu0 0.0
    %372 = vmatpush1.msra.mxu0 0.0
    %373 = vmatprep.subr.mxu0 0.0
    %374 = vmatpush1.msra.mxu0 0.0
    %375 = vmatprep.subr.mxu0 0.0
    %376 = vmatpush1.msra.mxu0 0.0
    %377 = vmatprep.subr.mxu0 0.0
    %378 = vmatpush1.msra.mxu0 0.0
    %379 = vmatprep.mubr.f32.mxu0 0.0
    %380 = vmatmul.mubr.f32.gmra.mrb[0].mxu0 %v313
    %v381 = vpop.f32.mrb[0].mxu0
    %v382 = vadd.f32 %v310, %v381
    %v383 = vpop.f32.mrb[0].mxu0
    %384 = vdwg.mxu0
    %385 = vst.msk [vmem:[#allocation4] sm:$0xff] %vm48, %v382
    // Predicated region
    $region38: #{autoencoder_forward.1} parent=1 // pred_check
      _
    $region39: #{autoencoder_forward.1} parent=1 // pred_check_branch
      %387 = sbr.rel (0) target = $region41
    $region40: #{autoencoder_forward.1} parent=1 // pred_region
      %s389 = ssub.s32 128, 128
      %390 = vsyncadd [#allocation3], %s389
      %s392 = sshll.u32 [#allocation2], 4
      %s393 = int_to_ptr.vmem [resolvable:$true] %s392
      %395 = dma.vmem_to_hbm [thread:$0]  %s393, 128, %s9, [#allocation3]
    $region41: #{autoencoder_forward.1} parent=1 // pred_fallthru
      _
    // Predicated region
    $region42: #{autoencoder_forward.1} parent=1 // pred_check
      _
    $region43: #{autoencoder_forward.1} parent=1 // pred_check_branch
      %397 = sbr.rel (0) target = $region45
    $region44: #{autoencoder_forward.1} parent=1 // pred_region
      %s399 = ssub.s32 128, 128
      %400 = vsyncadd [#allocation5], %s399
      %s402 = sshll.u32 [#allocation4], 4
      %s403 = int_to_ptr.vmem [resolvable:$true] %s402
      %405 = dma.vmem_to_hbm [thread:$0]  %s403, 128, %s10, [#allocation5]
    $region45: #{autoencoder_forward.1} parent=1 // pred_fallthru
      _
    // Predicated region
    $region46: #{autoencoder_forward.1} parent=1 // pred_check
      _
    $region47: #{autoencoder_forward.1} parent=1 // pred_check_branch
      %407 = sbr.rel (0) target = $region49
    $region48: #{autoencoder_forward.1} parent=1 // pred_region
      %408 = dma.done [#allocation3], 128
    $region49: #{autoencoder_forward.1} parent=1 // pred_fallthru
      _
    // Predicated region
    $region50: #{autoencoder_forward.1} parent=1 // pred_check
      _
    $region51: #{autoencoder_forward.1} parent=1 // pred_check_branch
      %410 = sbr.rel (0) target = $region53
    $region52: #{autoencoder_forward.1} parent=1 // pred_region
      %411 = dma.done [#allocation5], 128
    $region53: #{autoencoder_forward.1} parent=1 // pred_fallthru
      _
    %412 = vsyncpa [#allocation3], 1
    %413 = vsyncpa [#allocation5], 1

</llo_original>
